<compile_context>
chip_gen: v7x
topology: tpu7x:2x2x1
jax: 0.10.0
libtpu: 0.0.40
codegen_flags: <defaults>
</compile_context>

<pallas_src>
import numpy as np
import jax
import jax.numpy as jnp
from jax.experimental import pallas as pl
from jax.experimental.pallas import tpu as pltpu

# Zachary-karate-club adjacency matrix from the reference module (34x34).
A_LIST = [
    [0,1,1,1,1,1,1,1,1,0,1,1,1,1,0,0,0,1,0,1,0,1,0,0,0,0,0,0,0,0,0,1,0,0],
    [1,0,1,1,0,0,0,1,0,0,0,0,0,1,0,0,0,1,0,1,0,1,0,0,0,0,0,0,0,0,1,0,0,0],
    [1,1,0,1,0,0,0,1,1,1,0,0,0,1,0,0,0,0,0,0,0,0,0,0,0,0,0,1,1,0,0,0,1,0],
    [1,1,1,0,0,0,0,1,0,0,0,0,1,1,0,0,0,0,0,0,0,0,0,0,0,0,0,0,0,0,0,0,0,0],
    [1,0,0,0,0,0,1,0,0,0,1,0,0,0,0,0,0,0,0,0,0,0,0,0,0,0,0,0,0,0,0,0,0,0],
    [1,0,0,0,0,0,1,0,0,0,1,0,0,0,0,0,1,0,0,0,0,0,0,0,0,0,0,0,0,0,0,0,0,0],
    [1,0,0,0,1,1,0,0,0,0,0,0,0,0,0,0,1,0,0,0,0,0,0,0,0,0,0,0,0,0,0,0,0,0],
    [1,1,1,1,0,0,0,0,0,0,0,0,0,0,0,0,0,0,0,0,0,0,0,0,0,0,0,0,0,0,0,0,0,0],
    [1,0,1,0,0,0,0,0,0,0,0,0,0,0,0,0,0,0,0,0,0,0,0,0,0,0,0,0,0,0,1,0,1,1],
    [0,0,1,0,0,0,0,0,0,0,0,0,0,0,0,0,0,0,0,0,0,0,0,0,0,0,0,0,0,0,0,0,0,1],
    [1,0,0,0,1,1,0,0,0,0,0,0,0,0,0,0,0,0,0,0,0,0,0,0,0,0,0,0,0,0,0,0,0,0],
    [1,0,0,0,0,0,0,0,0,0,0,0,0,0,0,0,0,0,0,0,0,0,0,0,0,0,0,0,0,0,0,0,0,0],
    [1,0,0,1,0,0,0,0,0,0,0,0,0,0,0,0,0,0,0,0,0,0,0,0,0,0,0,0,0,0,0,0,0,0],
    [1,1,1,1,0,0,0,0,0,0,0,0,0,0,0,0,0,0,0,0,0,0,0,0,0,0,0,0,0,0,0,0,0,1],
    [0,0,0,0,0,0,0,0,0,0,0,0,0,0,0,0,0,0,0,0,0,0,0,0,0,0,0,0,0,0,0,0,1,1],
    [0,0,0,0,0,0,0,0,0,0,0,0,0,0,0,0,0,0,0,0,0,0,0,0,0,0,0,0,0,0,0,0,1,1],
    [0,0,0,0,0,1,1,0,0,0,0,0,0,0,0,0,0,0,0,0,0,0,0,0,0,0,0,0,0,0,0,0,0,0],
    [1,1,0,0,0,0,0,0,0,0,0,0,0,0,0,0,0,0,0,0,0,0,0,0,0,0,0,0,0,0,0,0,0,0],
    [0,0,0,0,0,0,0,0,0,0,0,0,0,0,0,0,0,0,0,0,0,0,0,0,0,0,0,0,0,0,0,0,1,1],
    [1,1,0,0,0,0,0,0,0,0,0,0,0,0,0,0,0,0,0,0,0,0,0,0,0,0,0,0,0,0,0,0,0,1],
    [0,0,0,0,0,0,0,0,0,0,0,0,0,0,0,0,0,0,0,0,0,0,0,0,0,0,0,0,0,0,0,0,1,1],
    [1,1,0,0,0,0,0,0,0,0,0,0,0,0,0,0,0,0,0,0,0,0,0,0,0,0,0,0,0,0,0,0,0,0],
    [0,0,0,0,0,0,0,0,0,0,0,0,0,0,0,0,0,0,0,0,0,0,0,0,0,0,0,0,0,0,0,0,1,1],
    [0,0,0,0,0,0,0,0,0,0,0,0,0,0,0,0,0,0,0,0,0,0,0,0,0,1,0,1,0,1,0,0,1,1],
    [0,0,0,0,0,0,0,0,0,0,0,0,0,0,0,0,0,0,0,0,0,0,0,0,0,1,0,1,0,0,0,1,0,0],
    [0,0,0,0,0,0,0,0,0,0,0,0,0,0,0,0,0,0,0,0,0,0,0,1,1,0,0,0,0,0,0,1,0,0],
    [0,0,0,0,0,0,0,0,0,0,0,0,0,0,0,0,0,0,0,0,0,0,0,0,0,0,0,0,0,1,0,0,0,1],
    [0,0,1,0,0,0,0,0,0,0,0,0,0,0,0,0,0,0,0,0,0,0,0,1,1,0,0,0,0,0,0,0,0,1],
    [0,0,1,0,0,0,0,0,0,0,0,0,0,0,0,0,0,0,0,0,0,0,0,0,0,0,0,0,0,0,0,1,0,1],
    [0,0,0,0,0,0,0,0,0,0,0,0,0,0,0,0,0,0,0,0,0,0,0,1,0,0,1,0,0,0,0,0,1,1],
    [0,1,0,0,0,0,0,0,1,0,0,0,0,0,0,0,0,0,0,0,0,0,0,0,0,0,0,0,0,0,0,0,1,1],
    [1,0,0,0,0,0,0,0,0,0,0,0,0,0,0,0,0,0,0,0,0,0,0,0,1,1,0,0,1,0,0,0,1,1],
    [0,0,1,0,0,0,0,0,1,0,0,0,0,0,1,1,0,0,1,0,1,0,1,1,0,0,0,0,0,1,1,1,0,1],
    [0,0,0,0,0,0,0,0,1,1,0,0,0,1,1,1,0,0,1,1,1,0,1,1,0,0,1,1,1,1,1,1,1,0],
]

_ROW_TILE = 256            # row-tile for the large-N grid path (multiple of 128)
_TILED_ROW_THRESHOLD = 512  # switch to the row-tiled/megacore path above this


def _round_up(x, m):
    return ((x + m - 1) // m) * m


def _pad2d(x, rows, cols):
    """Zero-pad a 2D array up to (rows, cols)."""
    r, c = x.shape
    return jnp.pad(x, ((0, rows - r), (0, cols - c)))


# ---------------------------------------------------------------------------
# Kernels
# ---------------------------------------------------------------------------

def _gcn_kernel(a_ref, x_ref, w_ref, o_ref):
    """relu(A @ (X @ W)), f32 MXU accumulation, no intermediate downcast."""
    xw = jnp.dot(x_ref[...], w_ref[...], preferred_element_type=jnp.float32)
    out = jnp.dot(a_ref[...], xw, preferred_element_type=jnp.float32)
    o_ref[...] = jnp.maximum(out, 0.0)


def _gcn_identity_kernel(a_ref, w_ref, o_ref):
    """relu(A @ W) -- X == eye(N) fast path (skips the X @ W matmul)."""
    out = jnp.dot(a_ref[...], w_ref[...], preferred_element_type=jnp.float32)
    o_ref[...] = jnp.maximum(out, 0.0)


def _matmul_kernel(l_ref, r_ref, o_ref):
    o_ref[...] = jnp.dot(l_ref[...], r_ref[...],
                         preferred_element_type=jnp.float32)


def _matmul_relu_kernel(l_ref, r_ref, o_ref):
    acc = jnp.dot(l_ref[...], r_ref[...], preferred_element_type=jnp.float32)
    o_ref[...] = jnp.maximum(acc, 0.0)


# ---------------------------------------------------------------------------
# pallas_call wrappers
# ---------------------------------------------------------------------------

def _vmem_spec():
    return pl.BlockSpec(memory_space=pltpu.MemorySpace.VMEM)


def _small_call(kernel, operands, out_shape):
    """Single un-gridded call, whole arrays resident in VMEM."""
    return pl.pallas_call(
        kernel,
        out_shape=jax.ShapeDtypeStruct(out_shape, jnp.float32),
        in_specs=[_vmem_spec() for _ in operands],
        out_specs=_vmem_spec(),
    )(*operands)


def _row_tiled_matmul(lhs, rhs, *, relu, tm=_ROW_TILE):
    """relu?(lhs @ rhs) with output rows tiled on a parallel grid.

    lhs: (M, K) with M % tm == 0; rhs: (K, N); K, N multiples of 128.
    The parallel grid axis lets the two v7x TensorCores split rows and keeps
    per-step VMEM bounded (works within v7x's 64 MiB / v5e's 16 MiB scoped
    default at these block sizes).
    """
    M, K = lhs.shape
    _, N = rhs.shape
    kernel = _matmul_relu_kernel if relu else _matmul_kernel
    return pl.pallas_call(
        kernel,
        out_shape=jax.ShapeDtypeStruct((M, N), jnp.float32),
        grid=(M // tm,),
        in_specs=[
            pl.BlockSpec((tm, K), lambda i: (i, 0)),
            pl.BlockSpec((K, N), lambda i: (0, 0)),
        ],
        out_specs=pl.BlockSpec((tm, N), lambda i: (i, 0)),
        compiler_params=pltpu.CompilerParams(
            dimension_semantics=("parallel",)),
    )(lhs, rhs)
    # TODO(synk): for very large graphs also tile the contraction dim (A_hat
    # columns) and raise vmem_limit_bytes explicitly instead of holding a full
    # (tm, N_padded) A row-slab per step.


# ---------------------------------------------------------------------------
# Public forward wrappers (jit'ed end-to-end so pad/slice glue fuses)
# ---------------------------------------------------------------------------

@jax.jit
def gcn_conv(a_hat, x, w):
    """relu(A_hat @ X @ W) for arbitrary node features X."""
    n = a_hat.shape[0]
    c_in = x.shape[1]
    c_out = w.shape[1]

    c_in_p = _round_up(c_in, 128)
    c_out_p = _round_up(c_out, 128)   # lane-dense output store

    if n <= _TILED_ROW_THRESHOLD:
        # Un-gridded single kernel; rows padded only to the 8-row f32 sublane
        # tile, contraction/lane dims padded to 128.
        row_p = _round_up(n, 8)
        k_p = _round_up(n, 128)       # A_hat columns == X rows (contraction)
        a_p = _pad2d(a_hat.astype(jnp.float32), row_p, k_p)
        x_p = _pad2d(x.astype(jnp.float32), k_p, c_in_p)
        w_p = _pad2d(w.astype(jnp.float32), c_in_p, c_out_p)
        out_p = _small_call(_gcn_kernel, (a_p, x_p, w_p), (row_p, c_out_p))
    else:
        # Row-tiled, megacore-parallel path for larger graphs.
        row_p = _round_up(n, _ROW_TILE)
        a_p = _pad2d(a_hat.astype(jnp.float32), row_p, row_p)
        x_p = _pad2d(x.astype(jnp.float32), row_p, c_in_p)
        w_p = _pad2d(w.astype(jnp.float32), c_in_p, c_out_p)
        xw_p = _row_tiled_matmul(x_p, w_p, relu=False)
        out_p = _row_tiled_matmul(a_p, xw_p, relu=True)

    # Padded rows/cols are exactly zero (relu(0) = 0); slice back to real size.
    return out_p[:n, :c_out]


@jax.jit
def gcn_conv_identity(a_hat, w):
    """relu(A_hat @ W) == relu(A_hat @ eye(N) @ W): identity-features fast path."""
    n = a_hat.shape[0]
    c_in, c_out = w.shape
    assert c_in == n, "identity fast path requires in_channels == num_nodes"

    c_out_p = _round_up(c_out, 128)
    if n <= _TILED_ROW_THRESHOLD:
        row_p = _round_up(n, 8)
        k_p = _round_up(n, 128)
        a_p = _pad2d(a_hat.astype(jnp.float32), row_p, k_p)
        w_p = _pad2d(w.astype(jnp.float32), k_p, c_out_p)
        out_p = _small_call(_gcn_identity_kernel, (a_p, w_p), (row_p, c_out_p))
    else:
        row_p = _round_up(n, _ROW_TILE)
        a_p = _pad2d(a_hat.astype(jnp.float32), row_p, row_p)
        w_p = _pad2d(w.astype(jnp.float32), row_p, c_out_p)
        out_p = _row_tiled_matmul(a_p, w_p, relu=True)
    return out_p[:n, :c_out]


def build_a_hat(a):
    """Parameter setup mirroring GCNConv.__init__ (plain JAX, init-time only).

    # TODO(synk): for very large N, fold the D^-1/2 row/col scaling into the
    # kernel as a VPU broadcast-multiply on the resident A tile instead of
    # materializing A_hat in HBM.
    """
    n = a.shape[0]
    a_hat = a + jnp.eye(n, dtype=a.dtype)
    deg = jnp.sum(a_hat, axis=1)
    d_inv_sqrt = jnp.sqrt(1.0 / deg)
    return (a_hat * d_inv_sqrt[:, None]) * d_inv_sqrt[None, :]


if __name__ == "__main__":
    A = jnp.asarray(np.array(A_LIST, dtype=np.float32))
    N = A.shape[0]                 # 34 nodes
    in_channels = N                # X = eye(N) -> in_channels = 34
    out_channels = 16

    # Deterministic parameter init: torch.rand ~ U[0,1) on (in, out).
    key = jax.random.PRNGKey(0)
    W = jax.random.uniform(key, (in_channels, out_channels), dtype=jnp.float32)

    A_hat = build_a_hat(A)
    X = jnp.eye(N, dtype=jnp.float32)
    ref = jnp.maximum(A_hat @ X @ W, 0.0)

    # 1) Identity fast path (matches the reference script's X = eye(N)).
    out = jax.block_until_ready(gcn_conv_identity(A_hat, W))
    np.testing.assert_allclose(np.asarray(out), np.asarray(ref),
                               rtol=2e-2, atol=2e-2)
    assert out.shape == (N, out_channels) and out.dtype == jnp.float32

    # 2) General two-matmul kernel with explicit X.
    out2 = jax.block_until_ready(gcn_conv(A_hat, X, W))
    np.testing.assert_allclose(np.asarray(out2), np.asarray(ref),
                               rtol=2e-2, atol=2e-2)

    # 3) Larger synthetic graph exercising the row-tiled, megacore-parallel path.
    kA, kX, kW = jax.random.split(jax.random.PRNGKey(1), 3)
    Nb, Cin_b, Cout_b = 600, 200, 100
    Ab = (jax.random.uniform(kA, (Nb, Nb)) < 0.05).astype(jnp.float32)
    Ab = jnp.maximum(Ab, Ab.T) * (1.0 - jnp.eye(Nb, dtype=jnp.float32))
    A_hat_b = build_a_hat(Ab)
    Xb = jax.random.uniform(kX, (Nb, Cin_b), dtype=jnp.float32)
    Wb = jax.random.uniform(kW, (Cin_b, Cout_b), dtype=jnp.float32)
    out_b = jax.block_until_ready(gcn_conv(A_hat_b, Xb, Wb))
    ref_b = jnp.maximum(A_hat_b @ Xb @ Wb, 0.0)
    np.testing.assert_allclose(np.asarray(out_b), np.asarray(ref_b),
                               rtol=2e-2, atol=1e-1)
    assert out_b.shape == (Nb, Cout_b)

    print("KERNEL_OK")
</pallas_src>

<mosaic_0001>
module attributes {stable_mosaic.version = 11 : i64} {
  func.func @_gcn_identity_kernel(%arg0: memref<40x128xf32, #tpu.memory_space<vmem>>, %arg1: memref<128x128xf32, #tpu.memory_space<vmem>>, %arg2: memref<40x128xf32, #tpu.memory_space<vmem>>) attributes {dimension_semantics = [], scalar_prefetch = 0 : i64, scratch_operands = 0 : i64, tpu.core_type = #tpu.core_type<tc>} {
    %c0 = arith.constant 0 : index
    %c0_0 = arith.constant 0 : index
    %0 = vector.load %arg0[%c0, %c0_0] : memref<40x128xf32, #tpu.memory_space<vmem>>, vector<40x128xf32>
    %c0_1 = arith.constant 0 : index
    %c0_2 = arith.constant 0 : index
    %1 = vector.load %arg1[%c0_1, %c0_2] : memref<128x128xf32, #tpu.memory_space<vmem>>, vector<128x128xf32>
    %cst = arith.constant dense<0.000000e+00> : vector<40x128xf32>
    %2 = tpu.matmul %0, %1, %cst {dimension_numbers = #tpu.dot_dimension_numbers<[1], [0], [0], [1], [0, 0, 1, 1], [], []>} : vector<40x128xf32>, vector<128x128xf32>, vector<40x128xf32> -> vector<40x128xf32>
    %cst_3 = arith.constant 0.000000e+00 : f32
    %3 = vector.broadcast %cst_3 : f32 to vector<40x128xf32>
    %4 = arith.maximumf %2, %3 : vector<40x128xf32>
    %c0_4 = arith.constant 0 : index
    %c0_5 = arith.constant 0 : index
    %5 = vector.load %arg2[%c0_4, %c0_5] : memref<40x128xf32, #tpu.memory_space<vmem>>, vector<40x128xf32>
    tpu.vector_store %arg2[%c0_4, %c0_5], %4 {strides = array<i32>} : memref<40x128xf32, #tpu.memory_space<vmem>>, vector<40x128xf32>,
    return
  }
}

</mosaic_0001>

<llo_original>
// kernel: gcn_conv_identity.1
$region0: #{gcn_conv_identity.1}
  #allocation0 [shape = 'u32[]', space=smem, size = 0x4, offset = 0x4, fixed_abs, tag = 'smem constant byte address 0x4 - core index']
  #allocation1 [shape = 'u32[144,128]{1,0:T(1,128)}', space=vmem, size = 0x12000, scoped, tag = 'internal scratch']
  %s0 = inlined_call_operand.vmem [shape: f32[40,128], index: 0, kind: input, shape index: {}]
  %s1 = inlined_call_operand.vmem [shape: f32[128,128], index: 1, kind: input, shape index: {}]
  %s2 = inlined_call_operand.vmem [shape: f32[40,128], index: 2, kind: output, shape index: {}]
  %s3 = sld [smem:[#allocation0]]
  $region18: #{gcn_conv_identity.1} parent=0
    _
  %s5 = ssub.s32 1, %s3
  %s6 = scalar_select 0, %s5, %s3
  // Predicated region
  $region2: #{gcn_conv_identity.1} parent=0 // pred_check
    _
  $region3: #{gcn_conv_identity.1} parent=0 // pred_check_branch
    %8 = sbr.rel (0) target = $region5
  $region4: #{gcn_conv_identity.1} parent=0 // pred_region
    _
  $region5: #{gcn_conv_identity.1} parent=0 // pred_fallthru
    _
  // Predicated region
  $region6: #{gcn_conv_identity.1} parent=0 // pred_check
    _
  $region7: #{gcn_conv_identity.1} parent=0 // pred_check_branch
    %10 = sbr.rel (0) target = $region9
  $region8: #{gcn_conv_identity.1} parent=0 // pred_region
    _
  $region9: #{gcn_conv_identity.1} parent=0 // pred_fallthru
    _
  %v11 = vld [vmem:[%s0] sm:$0xff]
  %v12 = vld [vmem:[%s0 + $0x8] sm:$0xff]
  %v13 = vld [vmem:[%s0 + $0x10] sm:$0xff]
  %v14 = vld [vmem:[%s0 + $0x18] sm:$0xff]
  %v15 = vld [vmem:[%s0 + $0x20] sm:$0xff]
  %v16 = vld [vmem:[%s1] sm:$0xff]
  %v17 = vld [vmem:[%s1 + $0x8] sm:$0xff]
  %v18 = vld [vmem:[%s1 + $0x10] sm:$0xff]
  %v19 = vld [vmem:[%s1 + $0x18] sm:$0xff]
  %v20 = vld [vmem:[%s1 + $0x20] sm:$0xff]
  %v21 = vld [vmem:[%s1 + $0x28] sm:$0xff]
  %v22 = vld [vmem:[%s1 + $0x30] sm:$0xff]
  %v23 = vld [vmem:[%s1 + $0x38] sm:$0xff]
  %v24 = vld [vmem:[%s1 + $0x40] sm:$0xff]
  %v25 = vld [vmem:[%s1 + $0x48] sm:$0xff]
  %v26 = vld [vmem:[%s1 + $0x50] sm:$0xff]
  %v27 = vld [vmem:[%s1 + $0x58] sm:$0xff]
  %v28 = vld [vmem:[%s1 + $0x60] sm:$0xff]
  %v29 = vld [vmem:[%s1 + $0x68] sm:$0xff]
  %v30 = vld [vmem:[%s1 + $0x70] sm:$0xff]
  %v31 = vld [vmem:[%s1 + $0x78] sm:$0xff]
  %32 = vmatprep.subr.mxu0 0.0
  %33 = vmatpush1.msra.mxu0 %v16
  %34 = vmatprep.subr.mxu0 0.0
  %35 = vmatpush1.msra.mxu0 %v17
  %36 = vmatprep.subr.mxu0 0.0
  %37 = vmatpush1.msra.mxu0 %v18
  %38 = vmatprep.subr.mxu0 0.0
  %39 = vmatpush1.msra.mxu0 %v19
  %40 = vmatprep.subr.mxu0 0.0
  %41 = vmatpush1.msra.mxu0 %v20
  %42 = vmatprep.subr.mxu0 0.0
  %43 = vmatpush1.msra.mxu0 %v21
  %44 = vmatprep.subr.mxu0 0.0
  %45 = vmatpush1.msra.mxu0 %v22
  %46 = vmatprep.subr.mxu0 0.0
  %47 = vmatpush1.msra.mxu0 %v23
  %48 = vmatprep.subr.mxu0 0.0
  %49 = vmatpush1.msra.mxu0 %v24
  %50 = vmatprep.subr.mxu0 0.0
  %51 = vmatpush1.msra.mxu0 %v25
  %52 = vmatprep.subr.mxu0 0.0
  %53 = vmatpush1.msra.mxu0 %v26
  %54 = vmatprep.subr.mxu0 0.0
  %55 = vmatpush1.msra.mxu0 %v27
  %56 = vmatprep.subr.mxu0 0.0
  %57 = vmatpush1.msra.mxu0 %v28
  %58 = vmatprep.subr.mxu0 0.0
  %59 = vmatpush1.msra.mxu0 %v29
  %60 = vmatprep.subr.mxu0 0.0
  %61 = vmatpush1.msra.mxu0 %v30
  %62 = vmatprep.subr.mxu0 0.0
  %63 = vmatpush1.msra.mxu0 %v31
  %64 = vmatprep.subr.mxu0 0.0
  %65 = vmatpush1.msra.mxu0 0.0
  %66 = vmatprep.subr.mxu0 0.0
  %67 = vmatpush1.msra.mxu0 0.0
  %68 = vmatprep.subr.mxu0 0.0
  %69 = vmatpush1.msra.mxu0 0.0
  %70 = vmatprep.subr.mxu0 0.0
  %71 = vmatpush1.msra.mxu0 0.0
  %72 = vmatprep.subr.mxu0 0.0
  %73 = vmatpush1.msra.mxu0 0.0
  %74 = vmatprep.subr.mxu0 0.0
  %75 = vmatpush1.msra.mxu0 0.0
  %76 = vmatprep.subr.mxu0 0.0
  %77 = vmatpush1.msra.mxu0 0.0
  %78 = vmatprep.subr.mxu0 0.0
  %79 = vmatpush1.msra.mxu0 0.0
  %80 = vmatprep.subr.mxu0 0.0
  %81 = vmatpush1.msra.mxu0 0.0
  %82 = vmatprep.subr.mxu0 0.0
  %83 = vmatpush1.msra.mxu0 0.0
  %84 = vmatprep.subr.mxu0 0.0
  %85 = vmatpush1.msra.mxu0 0.0
  %86 = vmatprep.subr.mxu0 0.0
  %87 = vmatpush1.msra.mxu0 0.0
  %88 = vmatprep.subr.mxu0 0.0
  %89 = vmatpush1.msra.mxu0 0.0
  %90 = vmatprep.subr.mxu0 0.0
  %91 = vmatpush1.msra.mxu0 0.0
  %92 = vmatprep.subr.mxu0 0.0
  %93 = vmatpush1.msra.mxu0 0.0
  %94 = vmatprep.subr.mxu0 0.0
  %95 = vmatpush1.msra.mxu0 0.0
  %96 = vmatprep.mubr.f32.mxu0 0.0
  %97 = vmatmul.mubr.f32.gmra.mrb[0].mxu0 %v11
  %v98 = vpop.f32.mrb[0].mxu0
  %v99 = vadd.f32 0.0, %v98
  %v100 = vpop.f32.mrb[0].mxu0
  %101 = vmatprep.mubr.f32.mxu0 0.0
  %102 = vmatmul.mubr.f32.gmra.mrb[0].mxu0 %v12
  %v103 = vpop.f32.mrb[0].mxu0
  %v104 = vadd.f32 0.0, %v103
  %v105 = vpop.f32.mrb[0].mxu0
  %106 = vmatprep.mubr.f32.mxu0 0.0
  %107 = vmatmul.mubr.f32.gmra.mrb[0].mxu0 %v13
  %v108 = vpop.f32.mrb[0].mxu0
  %v109 = vadd.f32 0.0, %v108
  %v110 = vpop.f32.mrb[0].mxu0
  %111 = vmatprep.mubr.f32.mxu0 0.0
  %112 = vmatmul.mubr.f32.gmra.mrb[0].mxu0 %v14
  %v113 = vpop.f32.mrb[0].mxu0
  %v114 = vadd.f32 0.0, %v113
  %v115 = vpop.f32.mrb[0].mxu0
  %116 = vmatprep.mubr.f32.mxu0 0.0
  %117 = vmatmul.mubr.f32.gmra.mrb[0].mxu0 %v15
  %v118 = vpop.f32.mrb[0].mxu0
  %v119 = vadd.f32 0.0, %v118
  %v120 = vpop.f32.mrb[0].mxu0
  %121 = vdwg.mxu0
  %v122 = vmax.f32 %v99, 0.0
  %v123 = vmax.f32 %v104, 0.0
  %v124 = vmax.f32 %v109, 0.0
  %v125 = vmax.f32 %v114, 0.0
  %v126 = vmax.f32 %v119, 0.0
  %127 = vst [vmem:[%s2] sm:$0xff] %v122
  %128 = vst [vmem:[%s2 + $0x8] sm:$0xff] %v123
  %129 = vst [vmem:[%s2 + $0x10] sm:$0xff] %v124
  %130 = vst [vmem:[%s2 + $0x18] sm:$0xff] %v125
  %131 = vst [vmem:[%s2 + $0x20] sm:$0xff] %v126
  // Predicated region
  $region10: #{gcn_conv_identity.1} parent=0 // pred_check
    _
  $region11: #{gcn_conv_identity.1} parent=0 // pred_check_branch
    %133 = sbr.rel (0) target = $region13
  $region12: #{gcn_conv_identity.1} parent=0 // pred_region
    _
  $region13: #{gcn_conv_identity.1} parent=0 // pred_fallthru
    _
  // Predicated region
  $region14: #{gcn_conv_identity.1} parent=0 // pred_check
    _
  $region15: #{gcn_conv_identity.1} parent=0 // pred_check_branch
    %135 = sbr.rel (0) target = $region17
  $region16: #{gcn_conv_identity.1} parent=0 // pred_region
    _
  $region17: #{gcn_conv_identity.1} parent=0 // pred_fallthru
    _

</llo_original>
